<compile_context>
chip_gen: v5e
topology: v5e:2x2
jax: 0.10.0
libtpu: 0.0.40
codegen_flags: <defaults>
</compile_context>

<pallas_src>
import jax
import jax.numpy as jnp
from jax.experimental import pallas as pl
from jax.experimental.pallas import tpu as pltpu

_LANES = 128          # vreg lane width: last dim must be a multiple of 128
_MAX_TILE_ROWS = 1024  # (1024, 128) f32 = 512 KiB/block -> 2 MiB live with
                       # double-buffered in+out; safe on v5e/v6e/v7x VMEM budgets


def _linreg_kernel(w_ref, b_ref, x_ref, o_ref):
    # w_ref, b_ref: SMEM scalars ((1,) each); x_ref, o_ref: VMEM (tile_rows, 128).
    w = w_ref[0]
    b = b_ref[0]
    o_ref[...] = x_ref[...] * w + b


def _round_up(x, m):
    return ((x + m - 1) // m) * m


def linear_regression(x, weight, bias):
    """x: (N, 1) f32; weight: (1, 1) f32; bias: (1,) f32 -> (N, 1) f32."""
    n = x.shape[0]
    dtype = x.dtype
    w_scalar = weight.reshape((1,)).astype(dtype)
    b_scalar = bias.reshape((1,)).astype(dtype)

    # Lane-dense layout: pad the flat element count up to a whole number of
    # (tile_rows, 128) blocks.
    rows = max(pl.cdiv(n, _LANES), 1)
    tile_rows = min(_MAX_TILE_ROWS, _round_up(rows, 8))  # sublane multiple of 8
    rows_padded = _round_up(rows, tile_rows)
    padded_len = rows_padded * _LANES

    x_flat = x.reshape((-1,))
    x_padded = jnp.zeros((padded_len,), dtype).at[:n].set(x_flat)
    x2d = x_padded.reshape((rows_padded, _LANES))

    grid = (rows_padded // tile_rows,)

    itemsize = jnp.dtype(dtype).itemsize
    cost = pl.CostEstimate(
        flops=2 * padded_len,                      # one mul + one add per element
        bytes_accessed=2 * padded_len * itemsize,  # read x + write y
        transcendentals=0,
    )

    y2d = pl.pallas_call(
        _linreg_kernel,
        out_shape=jax.ShapeDtypeStruct((rows_padded, _LANES), dtype),
        grid=grid,
        in_specs=[
            pl.BlockSpec(memory_space=pltpu.SMEM),              # weight scalar
            pl.BlockSpec(memory_space=pltpu.SMEM),              # bias scalar
            pl.BlockSpec((tile_rows, _LANES), lambda i: (i, 0)),  # x row tile
        ],
        out_specs=pl.BlockSpec((tile_rows, _LANES), lambda i: (i, 0)),
        compiler_params=pltpu.CompilerParams(
            dimension_semantics=("parallel",),  # lets v7x shard tiles across 2 TCs
        ),
        cost_estimate=cost,
    )(w_scalar, b_scalar, x2d)

    # Drop padding (padded lanes contain `b`, not 0) and restore (N, 1).
    return y2d.reshape((-1,))[:n].reshape((n, 1))


if __name__ == "__main__":
    key = jax.random.PRNGKey(0)
    k_w, k_b, k_x = jax.random.split(key, 3)

    # Deterministic parameter init matching torch.nn.Linear(1, 1) shapes.
    # torch default: U(-1/sqrt(fan_in), 1/sqrt(fan_in)) with fan_in=1 -> U(-1, 1).
    weight = jax.random.uniform(k_w, (1, 1), jnp.float32, minval=-1.0, maxval=1.0)
    bias = jax.random.uniform(k_b, (1,), jnp.float32, minval=-1.0, maxval=1.0)

    # Small input consistent with the forward: batch=8, in_features=1.
    x = jax.random.normal(k_x, (8, 1), jnp.float32)

    out = linear_regression(x, weight, bias)
    out = jax.block_until_ready(out)

    # Pure-JAX reference check.
    ref = x @ weight.T + bias
    assert out.shape == (8, 1)
    assert jnp.allclose(out, ref, atol=1e-6), (out, ref)

    print("KERNEL_OK")
</pallas_src>

<mosaic_0001>
module attributes {stable_mosaic.version = 11 : i64} {
  func.func @_linreg_kernel(%arg0: i32, %arg1: memref<1xf32, #tpu.memory_space<smem>>, %arg2: memref<1xf32, #tpu.memory_space<smem>>, %arg3: memref<8x128xf32, #tpu.memory_space<vmem>>, %arg4: memref<8x128xf32, #tpu.memory_space<vmem>>) attributes {dimension_semantics = [#tpu.dimension_semantics<parallel>], iteration_bounds = array<i64: 1>, scalar_prefetch = 0 : i64, scratch_operands = 0 : i64, tpu.core_type = #tpu.core_type<tc>, window_params = [{transform_indices = @transform_0, window_bounds = array<i64: 1>}, {transform_indices = @transform_1, window_bounds = array<i64: 1>}, {transform_indices = @transform_2, window_bounds = array<i64: 8, 128>}, {transform_indices = @transform_3, window_bounds = array<i64: 8, 128>}]} {
    %c0 = arith.constant 0 : index
    %0 = memref.load %arg1[%c0] : memref<1xf32, #tpu.memory_space<smem>>
    %c0_0 = arith.constant 0 : index
    %1 = memref.load %arg2[%c0_0] : memref<1xf32, #tpu.memory_space<smem>>
    %c0_1 = arith.constant 0 : index
    %c0_2 = arith.constant 0 : index
    %2 = vector.load %arg3[%c0_1, %c0_2] : memref<8x128xf32, #tpu.memory_space<vmem>>, vector<8x128xf32>
    %3 = vector.broadcast %0 : f32 to vector<8x128xf32>
    %4 = arith.mulf %2, %3 : vector<8x128xf32>
    %5 = vector.broadcast %1 : f32 to vector<8x128xf32>
    %6 = arith.addf %4, %5 : vector<8x128xf32>
    %c0_3 = arith.constant 0 : index
    %c0_4 = arith.constant 0 : index
    %7 = vector.load %arg4[%c0_3, %c0_4] : memref<8x128xf32, #tpu.memory_space<vmem>>, vector<8x128xf32>
    tpu.vector_store %arg4[%c0_3, %c0_4], %6 {strides = array<i32>} : memref<8x128xf32, #tpu.memory_space<vmem>>, vector<8x128xf32>,
    return
  }
  func.func @transform_0(%arg0: i32) -> i32 {
    %c0_i32 = arith.constant 0 : i32
    %c0_i32_0 = arith.constant 0 : i32
    return %c0_i32 : i32
  }
  func.func @transform_1(%arg0: i32) -> i32 {
    %c0_i32 = arith.constant 0 : i32
    %c0_i32_0 = arith.constant 0 : i32
    return %c0_i32 : i32
  }
  func.func @transform_2(%arg0: i32) -> (i32, i32) {
    %c0_i32 = arith.constant 0 : i32
    %c0_i32_0 = arith.constant 0 : i32
    return %arg0, %c0_i32 : i32, i32
  }
  func.func @transform_3(%arg0: i32) -> (i32, i32) {
    %c0_i32 = arith.constant 0 : i32
    %c0_i32_0 = arith.constant 0 : i32
    return %arg0, %c0_i32 : i32, i32
  }
}

</mosaic_0001>

<llo_original>
// kernel: tpu_custom_call.1
$region0: #{tpu_custom_call.1}
  #allocation0 [shape = 'u32[]', space=smem, size = 0x4, offset = 0x4, fixed_abs, tag = 'smem constant byte address 0x4 - core index']
  #allocation1 [shape = 'u32[72,128]{1,0:T(1,128)}', space=vmem, size = 0x9000, scoped, tag = 'internal scratch']
  #allocation2 [shape = 'f32[1]{0:T(128)S(6)}', space=smem, size = 0x200, scoped, tag = 'scoped memory for tpu_custom_call.1']
  #allocation3 [shape = 'f32[1]{0:T(128)S(6)}', space=smem, size = 0x200, scoped, tag = 'scoped memory for tpu_custom_call.1']
  %s0 = inlined_call_operand.<no memory space> [shape: f32[1], index: 0, kind: input, shape index: {}]
  %s1 = inlined_call_operand.<no memory space> [shape: f32[1], index: 1, kind: input, shape index: {}]
  %s2 = inlined_call_operand.hbm [shape: f32[8,128], index: 2, kind: input, shape index: {}]
  %s3 = inlined_call_operand.hbm [shape: f32[8,128], index: 3, kind: output, shape index: {}]
  %s4 = sld [smem:[#allocation0]]
  $region26: #{tpu_custom_call.1} parent=0
    _
  %s6 = ssub.s32 1, %s4
  %s7 = scalar_select 0, %s6, %s4
  %8 = sst [smem:[#allocation2]] %s0
  %9 = sst [smem:[#allocation3]] %s1
  $region1: #{tpu_custom_call.1} parent=0
    #allocation4 [shape = 'u8[4096]{0}', space=vmem, size = 0x1000, scoped, tag = 'input window, operand 2, single buffered']
    #allocation5 [shape = 's32[1]{0}', space=sflag, size = 0x4, scoped, tag = 'scoped memory for tpu_custom_call.1']
    #allocation6 [shape = 's32[1]{0}', space=sflag, size = 0x4, scoped, tag = 'scoped memory for tpu_custom_call.1']
    #allocation7 [shape = 'u8[4096]{0}', space=vmem, size = 0x1000, scoped, tag = 'output window, operand 0, single buffered']
    %10 = vsyncpa [#allocation5], 0
    %11 = vsyncpa [#allocation6], 0
    // Predicated region
    $region2: #{tpu_custom_call.1} parent=1 // pred_check
      _
    $region3: #{tpu_custom_call.1} parent=1 // pred_check_branch
      %13 = sbr.rel (0) target = $region5
    $region4: #{tpu_custom_call.1} parent=1 // pred_region
      _
    $region5: #{tpu_custom_call.1} parent=1 // pred_fallthru
      _
    // Predicated region
    $region6: #{tpu_custom_call.1} parent=1 // pred_check
      _
    $region7: #{tpu_custom_call.1} parent=1 // pred_check_branch
      %15 = sbr.rel (0) target = $region9
    $region8: #{tpu_custom_call.1} parent=1 // pred_region
      _
    $region9: #{tpu_custom_call.1} parent=1 // pred_fallthru
      _
    // Predicated region
    $region10: #{tpu_custom_call.1} parent=1 // pred_check
      _
    $region11: #{tpu_custom_call.1} parent=1 // pred_check_branch
      %17 = sbr.rel (0) target = $region13
    $region12: #{tpu_custom_call.1} parent=1 // pred_region
      %19 = vsyncadd [#allocation5], 0
      %s21 = sshll.u32 %s2, 4
      %s22 = int_to_ptr.hbm [resolvable:$true] %s21
      %s23 = sshll.u32 [#allocation4], 4
      %s24 = int_to_ptr.vmem [resolvable:$true] %s23
      %26 = dma.hbm_to_vmem [thread:$0]  %s22, 128, %s24, [#allocation5]
    $region13: #{tpu_custom_call.1} parent=1 // pred_fallthru
      _
    // Predicated region
    $region14: #{tpu_custom_call.1} parent=1 // pred_check
      _
    $region15: #{tpu_custom_call.1} parent=1 // pred_check_branch
      %28 = sbr.rel (0) target = $region17
    $region16: #{tpu_custom_call.1} parent=1 // pred_region
      %30 = dma.done [#allocation5], 128
    $region17: #{tpu_custom_call.1} parent=1 // pred_fallthru
      _
    %s31 = sld [smem:[#allocation2]]
    %s32 = sld [smem:[#allocation3]]
    %v33 = vld [vmem:[#allocation4] sm:$0xff]
    %v34 = vstv %s31
    %v35 = vmul.f32 %v33, %v34
    %v36 = vstv %s32
    %v37 = vadd.f32 %v35, %v36
    %38 = vst [vmem:[#allocation7] sm:$0xff] %v37
    // Predicated region
    $region18: #{tpu_custom_call.1} parent=1 // pred_check
      _
    $region19: #{tpu_custom_call.1} parent=1 // pred_check_branch
      %40 = sbr.rel (0) target = $region21
    $region20: #{tpu_custom_call.1} parent=1 // pred_region
      %42 = vsyncadd [#allocation6], 0
      %s44 = sshll.u32 [#allocation7], 4
      %s45 = int_to_ptr.vmem [resolvable:$true] %s44
      %s46 = sshll.u32 %s3, 4
      %s47 = int_to_ptr.hbm [resolvable:$true] %s46
      %49 = dma.vmem_to_hbm [thread:$0]  %s45, 128, %s47, [#allocation6]
    $region21: #{tpu_custom_call.1} parent=1 // pred_fallthru
      _
    // Predicated region
    $region22: #{tpu_custom_call.1} parent=1 // pred_check
      _
    $region23: #{tpu_custom_call.1} parent=1 // pred_check_branch
      %51 = sbr.rel (0) target = $region25
    $region24: #{tpu_custom_call.1} parent=1 // pred_region
      %53 = dma.done [#allocation6], 128
    $region25: #{tpu_custom_call.1} parent=1 // pred_fallthru
      _
    %54 = vsyncpa [#allocation5], 1
    %55 = vsyncpa [#allocation6], 1

</llo_original>
